<compile_context>
chip_gen: v6e
topology: v6e:2x2x1
jax: 0.10.0
libtpu: 0.0.40
codegen_flags: <defaults>
</compile_context>

<pallas_src>
import jax
import jax.numpy as jnp
from jax.experimental import pallas as pl
from jax.experimental.pallas import tpu as pltpu


def _edsr_kernel(x_ref, w1_ref, b1_ref, w2_ref, b2_ref, wr_ref, o_ref):
    # x_ref : (1, H, W*Cin)   one batch element, channels flattened into lanes
    # w1_ref: (3, W*Cin, N)   banded conv1 weights, N = W*Cout, one slab per kh
    # b1_ref: (1, N)          conv1 bias tiled across W
    # w2_ref: (3, N, N)       banded conv2 weights
    # b2_ref: (1, N)          conv2 bias tiled across W
    # wr_ref: (W*Cin, N)      block-diagonal 1x1 residual conv (no bias)
    # o_ref : (1, H, N)       lane-dense output slab
    H = o_ref.shape[1]
    N = o_ref.shape[2]

    x = x_ref[0]  # (H, W*Cin) -- tiny, stays in a couple of vregs

    def conv_rows(a, wband_ref, brow):
        # Center tap (kh=1): contributes to every output row.
        acc = jnp.dot(a, wband_ref[1], preferred_element_type=jnp.float32)
        # kh=0: out[h] += a[h-1] @ M0  (valid for h >= 1)
        top = jnp.dot(a[: H - 1], wband_ref[0], preferred_element_type=jnp.float32)
        # kh=2: out[h] += a[h+1] @ M2  (valid for h <= H-2)
        bot = jnp.dot(a[1:], wband_ref[2], preferred_element_type=jnp.float32)
        zrow = jnp.zeros((1, N), jnp.float32)
        acc = acc + jnp.concatenate([zrow, top], axis=0)
        acc = acc + jnp.concatenate([bot, zrow], axis=0)
        return acc + brow  # (H, N)

    # conv1 (3x3, pad=1, bias) + ReLU
    y1 = jnp.maximum(conv_rows(x, w1_ref, b1_ref[...]), 0.0)
    # conv2 (3x3, pad=1, bias)
    y2 = conv_rows(y1, w2_ref, b2_ref[...])
    # residual 1x1 conv (no bias)
    res = jnp.dot(x, wr_ref[...], preferred_element_type=jnp.float32)

    o_ref[0] = (y2 + res).astype(o_ref.dtype)


def _band_from_3x3(wk, W):
    """wk: (3, 3, Ci, Co) HWIO -> (3, W*Ci, W*Co) block-Toeplitz matrices.

    M_kh[(w+kw-1)*Ci + ci, w*Co + co] = wk[kh, kw, ci, co], with taps that
    would read outside [0, W) dropped (that is the W-direction zero padding).
    """
    mats = []
    for kh in range(3):
        m = jnp.zeros((W * wk.shape[2], W * wk.shape[3]), wk.dtype)
        for kw in range(3):
            m = m + jnp.kron(jnp.eye(W, k=1 - kw, dtype=wk.dtype), wk[kh, kw])
        mats.append(m)
    return jnp.stack(mats)


def edsr_conv_pallas(x_nchw, w1, b1, w2, b2, wr):
    """x_nchw: (B, Cin, H, W). Conv weights in HWIO. Returns (B, Cout, H, W)."""
    B, Cin, H, W = x_nchw.shape
    Cout = w1.shape[-1]
    N = W * Cout

    # Single fused transpose+reshape to the lane-dense (B, H, W*Cin) layout.
    x_rows = jnp.transpose(x_nchw, (0, 2, 3, 1)).reshape(B, H, W * Cin)

    # Fold kw taps + W-boundary padding into the matmul operands (host side,
    # small: O(W^2 * C^2) floats for these shapes).
    w1b = _band_from_3x3(w1, W)                       # (3, W*Cin, N)
    w2b = _band_from_3x3(w2, W)                       # (3, N, N)
    wrb = jnp.kron(jnp.eye(W, dtype=wr.dtype), wr)    # (W*Cin, N)
    b1row = jnp.tile(b1, W).reshape(1, N)
    b2row = jnp.tile(b2, W).reshape(1, N)

    out_rows = pl.pallas_call(
        _edsr_kernel,
        out_shape=jax.ShapeDtypeStruct((B, H, N), jnp.float32),
        grid_spec=pltpu.PrefetchScalarGridSpec(
            num_scalar_prefetch=0,
            grid=(B,),
            in_specs=[
                pl.BlockSpec((1, H, W * Cin), lambda b: (b, 0, 0)),
                pl.BlockSpec((3, W * Cin, N), lambda b: (0, 0, 0)),
                pl.BlockSpec((1, N), lambda b: (0, 0)),
                pl.BlockSpec((3, N, N), lambda b: (0, 0, 0)),
                pl.BlockSpec((1, N), lambda b: (0, 0)),
                pl.BlockSpec((W * Cin, N), lambda b: (0, 0)),
            ],
            out_specs=pl.BlockSpec((1, H, N), lambda b: (b, 0, 0)),
        ),
        compiler_params=pltpu.CompilerParams(
            dimension_semantics=("parallel",),
            vmem_limit_bytes=32 * 1024 * 1024,  # safe on v5e/v6e and v7x (64 MiB VMEM)
        ),
    )(x_rows, w1b, b1row, w2b, b2row, wrb)

    # Lane-dense slab back to NCHW to match PyTorch semantics.
    return jnp.transpose(out_rows.reshape(B, H, W, Cout), (0, 3, 1, 2))


def edsr_conv_reference(x_nchw, w1, b1, w2, b2, wr):
    """Plain-JAX reference (NCHW, mirrors the PyTorch forward)."""
    dn = ("NCHW", "HWIO", "NCHW")
    y = jax.lax.conv_general_dilated(x_nchw, w1, (1, 1), "SAME", dimension_numbers=dn)
    y = y + b1[None, :, None, None]
    y = jnp.maximum(y, 0.0)
    y = jax.lax.conv_general_dilated(y, w2, (1, 1), "SAME", dimension_numbers=dn)
    y = y + b2[None, :, None, None]
    r = jax.lax.conv_general_dilated(
        x_nchw, wr[None, None, :, :], (1, 1), "SAME", dimension_numbers=dn
    )
    return y + r


if __name__ == "__main__":
    B, Cin, Cout, H, W = 2, 4, 8, 16, 16

    key = jax.random.PRNGKey(0)
    kx, k1, kb1, k2, kb2, kr = jax.random.split(key, 6)

    x = jax.random.normal(kx, (B, Cin, H, W), dtype=jnp.float32)
    w1 = jax.random.normal(k1, (3, 3, Cin, Cout), dtype=jnp.float32) * 0.1
    b1 = jax.random.normal(kb1, (Cout,), dtype=jnp.float32) * 0.1
    w2 = jax.random.normal(k2, (3, 3, Cout, Cout), dtype=jnp.float32) * 0.1
    b2 = jax.random.normal(kb2, (Cout,), dtype=jnp.float32) * 0.1
    wr = jax.random.normal(kr, (Cin, Cout), dtype=jnp.float32) * 0.1

    out = jax.block_until_ready(edsr_conv_pallas(x, w1, b1, w2, b2, wr))
    ref = jax.block_until_ready(edsr_conv_reference(x, w1, b1, w2, b2, wr))

    assert out.shape == (B, Cout, H, W), out.shape
    assert jnp.allclose(out, ref, rtol=1e-3, atol=1e-3), float(jnp.max(jnp.abs(out - ref)))

    print("KERNEL_OK")
</pallas_src>

<mosaic_0001>
module attributes {stable_mosaic.version = 11 : i64} {
  func.func @_edsr_kernel(%arg0: i32, %arg1: memref<1x16x64xf32, #tpu.memory_space<vmem>>, %arg2: memref<3x64x128xf32, #tpu.memory_space<vmem>>, %arg3: memref<1x128xf32, #tpu.memory_space<vmem>>, %arg4: memref<3x128x128xf32, #tpu.memory_space<vmem>>, %arg5: memref<1x128xf32, #tpu.memory_space<vmem>>, %arg6: memref<64x128xf32, #tpu.memory_space<vmem>>, %arg7: memref<1x16x128xf32, #tpu.memory_space<vmem>>) attributes {dimension_semantics = [#tpu.dimension_semantics<parallel>], iteration_bounds = array<i64: 2>, scalar_prefetch = 0 : i64, scratch_operands = 0 : i64, tpu.core_type = #tpu.core_type<tc>, window_params = [{transform_indices = @transform_0, window_bounds = array<i64: 1, 16, 64>}, {pipeline_mode = #tpu.pipeline_mode<synchronous>, transform_indices = @transform_1, window_bounds = array<i64: 3, 64, 128>}, {pipeline_mode = #tpu.pipeline_mode<synchronous>, transform_indices = @transform_2, window_bounds = array<i64: 1, 128>}, {pipeline_mode = #tpu.pipeline_mode<synchronous>, transform_indices = @transform_3, window_bounds = array<i64: 3, 128, 128>}, {pipeline_mode = #tpu.pipeline_mode<synchronous>, transform_indices = @transform_4, window_bounds = array<i64: 1, 128>}, {pipeline_mode = #tpu.pipeline_mode<synchronous>, transform_indices = @transform_5, window_bounds = array<i64: 64, 128>}, {transform_indices = @transform_6, window_bounds = array<i64: 1, 16, 128>}]} {
    %c0 = arith.constant 0 : index
    %c0_0 = arith.constant 0 : index
    %c0_1 = arith.constant 0 : index
    %0 = vector.load %arg1[%c0, %c0_0, %c0_1] : memref<1x16x64xf32, #tpu.memory_space<vmem>>, vector<1x16x64xf32>
    %1 = vector.shape_cast %0 : vector<1x16x64xf32> to vector<16x64xf32>
    %c0_2 = arith.constant 0 : index
    %c0_3 = arith.constant 0 : index
    %2 = vector.load %arg3[%c0_2, %c0_3] : memref<1x128xf32, #tpu.memory_space<vmem>>, vector<1x128xf32>
    %c1 = arith.constant 1 : index
    %c0_4 = arith.constant 0 : index
    %c0_5 = arith.constant 0 : index
    %3 = vector.load %arg2[%c1, %c0_4, %c0_5] : memref<3x64x128xf32, #tpu.memory_space<vmem>>, vector<1x64x128xf32>
    %4 = vector.shape_cast %3 : vector<1x64x128xf32> to vector<64x128xf32>
    %cst = arith.constant dense<0.000000e+00> : vector<16x128xf32>
    %5 = tpu.matmul %1, %4, %cst {dimension_numbers = #tpu.dot_dimension_numbers<[1], [0], [0], [1], [0, 0, 1, 1], [], []>} : vector<16x64xf32>, vector<64x128xf32>, vector<16x128xf32> -> vector<16x128xf32>
    %6 = vector.extract_strided_slice %1 {offsets = [0, 0], sizes = [15, 64], strides = [1, 1]} : vector<16x64xf32> to vector<15x64xf32>
    %c0_6 = arith.constant 0 : index
    %c0_7 = arith.constant 0 : index
    %c0_8 = arith.constant 0 : index
    %7 = vector.load %arg2[%c0_6, %c0_7, %c0_8] : memref<3x64x128xf32, #tpu.memory_space<vmem>>, vector<1x64x128xf32>
    %8 = vector.shape_cast %7 : vector<1x64x128xf32> to vector<64x128xf32>
    %cst_9 = arith.constant dense<0.000000e+00> : vector<15x128xf32>
    %9 = tpu.matmul %6, %8, %cst_9 {dimension_numbers = #tpu.dot_dimension_numbers<[1], [0], [0], [1], [0, 0, 1, 1], [], []>} : vector<15x64xf32>, vector<64x128xf32>, vector<15x128xf32> -> vector<15x128xf32>
    %10 = vector.extract_strided_slice %1 {offsets = [1, 0], sizes = [15, 64], strides = [1, 1]} : vector<16x64xf32> to vector<15x64xf32>
    %c2 = arith.constant 2 : index
    %c0_10 = arith.constant 0 : index
    %c0_11 = arith.constant 0 : index
    %11 = vector.load %arg2[%c2, %c0_10, %c0_11] : memref<3x64x128xf32, #tpu.memory_space<vmem>>, vector<1x64x128xf32>
    %12 = vector.shape_cast %11 : vector<1x64x128xf32> to vector<64x128xf32>
    %cst_12 = arith.constant dense<0.000000e+00> : vector<15x128xf32>
    %13 = tpu.matmul %10, %12, %cst_12 {dimension_numbers = #tpu.dot_dimension_numbers<[1], [0], [0], [1], [0, 0, 1, 1], [], []>} : vector<15x64xf32>, vector<64x128xf32>, vector<15x128xf32> -> vector<15x128xf32>
    %cst_13 = arith.constant 0.000000e+00 : f32
    %14 = vector.broadcast %cst_13 : f32 to vector<1x128xf32>
    %15 = tpu.concatenate %14, %9 in 0 : vector<1x128xf32>, vector<15x128xf32> -> vector<16x128xf32>
    %16 = arith.addf %5, %15 : vector<16x128xf32>
    %17 = tpu.concatenate %13, %14 in 0 : vector<15x128xf32>, vector<1x128xf32> -> vector<16x128xf32>
    %18 = arith.addf %16, %17 : vector<16x128xf32>
    %19 = vector.broadcast %2 : vector<1x128xf32> to vector<16x128xf32>
    %20 = arith.addf %18, %19 : vector<16x128xf32>
    %cst_14 = arith.constant 0.000000e+00 : f32
    %21 = vector.broadcast %cst_14 : f32 to vector<16x128xf32>
    %22 = arith.maximumf %20, %21 : vector<16x128xf32>
    %c0_15 = arith.constant 0 : index
    %c0_16 = arith.constant 0 : index
    %23 = vector.load %arg5[%c0_15, %c0_16] : memref<1x128xf32, #tpu.memory_space<vmem>>, vector<1x128xf32>
    %c1_17 = arith.constant 1 : index
    %c0_18 = arith.constant 0 : index
    %c0_19 = arith.constant 0 : index
    %24 = vector.load %arg4[%c1_17, %c0_18, %c0_19] : memref<3x128x128xf32, #tpu.memory_space<vmem>>, vector<1x128x128xf32>
    %25 = vector.shape_cast %24 : vector<1x128x128xf32> to vector<128x128xf32>
    %cst_20 = arith.constant dense<0.000000e+00> : vector<16x128xf32>
    %26 = tpu.matmul %22, %25, %cst_20 {dimension_numbers = #tpu.dot_dimension_numbers<[1], [0], [0], [1], [0, 0, 1, 1], [], []>} : vector<16x128xf32>, vector<128x128xf32>, vector<16x128xf32> -> vector<16x128xf32>
    %27 = vector.extract_strided_slice %22 {offsets = [0, 0], sizes = [15, 128], strides = [1, 1]} : vector<16x128xf32> to vector<15x128xf32>
    %c0_21 = arith.constant 0 : index
    %c0_22 = arith.constant 0 : index
    %c0_23 = arith.constant 0 : index
    %28 = vector.load %arg4[%c0_21, %c0_22, %c0_23] : memref<3x128x128xf32, #tpu.memory_space<vmem>>, vector<1x128x128xf32>
    %29 = vector.shape_cast %28 : vector<1x128x128xf32> to vector<128x128xf32>
    %cst_24 = arith.constant dense<0.000000e+00> : vector<15x128xf32>
    %30 = tpu.matmul %27, %29, %cst_24 {dimension_numbers = #tpu.dot_dimension_numbers<[1], [0], [0], [1], [0, 0, 1, 1], [], []>} : vector<15x128xf32>, vector<128x128xf32>, vector<15x128xf32> -> vector<15x128xf32>
    %31 = vector.extract_strided_slice %22 {offsets = [1, 0], sizes = [15, 128], strides = [1, 1]} : vector<16x128xf32> to vector<15x128xf32>
    %c2_25 = arith.constant 2 : index
    %c0_26 = arith.constant 0 : index
    %c0_27 = arith.constant 0 : index
    %32 = vector.load %arg4[%c2_25, %c0_26, %c0_27] : memref<3x128x128xf32, #tpu.memory_space<vmem>>, vector<1x128x128xf32>
    %33 = vector.shape_cast %32 : vector<1x128x128xf32> to vector<128x128xf32>
    %cst_28 = arith.constant dense<0.000000e+00> : vector<15x128xf32>
    %34 = tpu.matmul %31, %33, %cst_28 {dimension_numbers = #tpu.dot_dimension_numbers<[1], [0], [0], [1], [0, 0, 1, 1], [], []>} : vector<15x128xf32>, vector<128x128xf32>, vector<15x128xf32> -> vector<15x128xf32>
    %cst_29 = arith.constant 0.000000e+00 : f32
    %35 = vector.broadcast %cst_29 : f32 to vector<1x128xf32>
    %36 = tpu.concatenate %35, %30 in 0 : vector<1x128xf32>, vector<15x128xf32> -> vector<16x128xf32>
    %37 = arith.addf %26, %36 : vector<16x128xf32>
    %38 = tpu.concatenate %34, %35 in 0 : vector<15x128xf32>, vector<1x128xf32> -> vector<16x128xf32>
    %39 = arith.addf %37, %38 : vector<16x128xf32>
    %40 = vector.broadcast %23 : vector<1x128xf32> to vector<16x128xf32>
    %41 = arith.addf %39, %40 : vector<16x128xf32>
    %c0_30 = arith.constant 0 : index
    %c0_31 = arith.constant 0 : index
    %42 = vector.load %arg6[%c0_30, %c0_31] : memref<64x128xf32, #tpu.memory_space<vmem>>, vector<64x128xf32>
    %cst_32 = arith.constant dense<0.000000e+00> : vector<16x128xf32>
    %43 = tpu.matmul %1, %42, %cst_32 {dimension_numbers = #tpu.dot_dimension_numbers<[1], [0], [0], [1], [0, 0, 1, 1], [], []>} : vector<16x64xf32>, vector<64x128xf32>, vector<16x128xf32> -> vector<16x128xf32>
    %44 = arith.addf %41, %43 : vector<16x128xf32>
    %c0_33 = arith.constant 0 : index
    %c0_34 = arith.constant 0 : index
    %c0_35 = arith.constant 0 : index
    %45 = vector.load %arg7[%c0_33, %c0_34, %c0_35] : memref<1x16x128xf32, #tpu.memory_space<vmem>>, vector<1x16x128xf32>
    %46 = vector.shape_cast %45 : vector<1x16x128xf32> to vector<16x128xf32>
    %47 = vector.shape_cast %44 : vector<16x128xf32> to vector<1x16x128xf32>
    tpu.vector_store %arg7[%c0_33, %c0_34, %c0_35], %47 {strides = array<i32>} : memref<1x16x128xf32, #tpu.memory_space<vmem>>, vector<1x16x128xf32>,
    return
  }
  func.func @transform_0(%arg0: i32) -> (i32, i32, i32) {
    %c0_i32 = arith.constant 0 : i32
    %c0_i32_0 = arith.constant 0 : i32
    %c0_i32_1 = arith.constant 0 : i32
    return %arg0, %c0_i32, %c0_i32_0 : i32, i32, i32
  }
  func.func @transform_1(%arg0: i32) -> (i32, i32, i32) {
    %c0_i32 = arith.constant 0 : i32
    %c0_i32_0 = arith.constant 0 : i32
    %c0_i32_1 = arith.constant 0 : i32
    %c0_i32_2 = arith.constant 0 : i32
    return %c0_i32, %c0_i32_0, %c0_i32_1 : i32, i32, i32
  }
  func.func @transform_2(%arg0: i32) -> (i32, i32) {
    %c0_i32 = arith.constant 0 : i32
    %c0_i32_0 = arith.constant 0 : i32
    %c0_i32_1 = arith.constant 0 : i32
    return %c0_i32, %c0_i32_0 : i32, i32
  }
  func.func @transform_3(%arg0: i32) -> (i32, i32, i32) {
    %c0_i32 = arith.constant 0 : i32
    %c0_i32_0 = arith.constant 0 : i32
    %c0_i32_1 = arith.constant 0 : i32
    %c0_i32_2 = arith.constant 0 : i32
    return %c0_i32, %c0_i32_0, %c0_i32_1 : i32, i32, i32
  }
  func.func @transform_4(%arg0: i32) -> (i32, i32) {
    %c0_i32 = arith.constant 0 : i32
    %c0_i32_0 = arith.constant 0 : i32
    %c0_i32_1 = arith.constant 0 : i32
    return %c0_i32, %c0_i32_0 : i32, i32
  }
  func.func @transform_5(%arg0: i32) -> (i32, i32) {
    %c0_i32 = arith.constant 0 : i32
    %c0_i32_0 = arith.constant 0 : i32
    %c0_i32_1 = arith.constant 0 : i32
    return %c0_i32, %c0_i32_0 : i32, i32
  }
  func.func @transform_6(%arg0: i32) -> (i32, i32, i32) {
    %c0_i32 = arith.constant 0 : i32
    %c0_i32_0 = arith.constant 0 : i32
    %c0_i32_1 = arith.constant 0 : i32
    return %arg0, %c0_i32, %c0_i32_0 : i32, i32, i32
  }
}

</mosaic_0001>

<llo_original>
// kernel: tpu_custom_call.1
$region0: #{tpu_custom_call.1}
  #allocation0 [shape = 'u32[]', space=smem, size = 0x4, offset = 0x4, fixed_abs, tag = 'smem constant byte address 0x4 - core index']
  #allocation1 [shape = 'u32[144,128]{1,0:T(1,128)}', space=vmem, size = 0x12000, scoped, tag = 'internal scratch']
  %s0 = inlined_call_operand.hbm [shape: f32[2,16,64], index: 0, kind: input, shape index: {}]
  %s1 = inlined_call_operand.hbm [shape: f32[3,64,128], index: 1, kind: input, shape index: {}]
  %s2 = inlined_call_operand.vmem [shape: f32[1,128], index: 2, kind: input, shape index: {}]
  %s3 = inlined_call_operand.hbm [shape: f32[3,128,128], index: 3, kind: input, shape index: {}]
  %s4 = inlined_call_operand.vmem [shape: f32[1,128], index: 4, kind: input, shape index: {}]
  %s5 = inlined_call_operand.hbm [shape: f32[64,128], index: 5, kind: input, shape index: {}]
  %s6 = inlined_call_operand.hbm [shape: f32[2,16,128], index: 6, kind: output, shape index: {}]
  %s7 = sld [smem:[#allocation0]]
  $region73: #{tpu_custom_call.1} parent=0
    _
  %s9 = ssub.s32 1, %s7
  %s10 = scalar_select 0, %s9, %s7
  $region1: #{tpu_custom_call.1} parent=0
    #allocation2 [shape = 'u8[16384]{0}', space=vmem, size = 0x4000, scoped, tag = 'input window, operand 0']
    #allocation3 [shape = 's32[2]{0}', space=sflag, size = 0x8, scoped, tag = 'scoped memory for tpu_custom_call.1']
    #allocation4 [shape = 's32[2]{0}', space=sflag, size = 0x8, scoped, tag = 'scoped memory for tpu_custom_call.1']
    #allocation5 [shape = 'u8[98304]{0}', space=vmem, size = 0x18000, scoped, tag = 'input window, operand 1, single buffered']
    #allocation6 [shape = 's32[1]{0}', space=sflag, size = 0x4, scoped, tag = 'scoped memory for tpu_custom_call.1']
    #allocation7 [shape = 'u8[196608]{0}', space=vmem, size = 0x30000, scoped, tag = 'input window, operand 3, single buffered']
    #allocation8 [shape = 'u8[32768]{0}', space=vmem, size = 0x8000, scoped, tag = 'input window, operand 5, single buffered']
    #allocation9 [shape = 's32[1]{0}', space=sflag, size = 0x4, scoped, tag = 'scoped memory for tpu_custom_call.1']
    #allocation10 [shape = 'u8[16384]{0}', space=vmem, size = 0x4000, scoped, tag = 'output window, operand 0']
    %11 = vsyncpa [#allocation3], 0
    %s12 = scalar_lea.sflag [#allocation3], 1
    %13 = vsyncpa %s12, 0
    %14 = vsyncpa [#allocation6], 0
    %15 = vsyncpa [#allocation9], 0
    %16 = vsyncpa [#allocation4], 0
    %s17 = scalar_lea.sflag [#allocation4], 1
    %18 = vsyncpa %s17, 0
    loop: start=0, step=1, limit=4
    $region2: #{tpu_custom_call.1} parent=1 // loop_pre_header
      _
    $region3: #{tpu_custom_call.1} parent=1 // loop_header
      %s20 = sphi 0, %s24
      %p21 = scmp.ge.s32.totalorder %s20, 4
      %s30 = sphi 0, %s32
      %s33 = sphi 0, %s30
      %s34 = sphi 0, %s33
      %s50 = sphi 0, %s34
      %s54 = sphi 0, %s54
      %s56 = sphi 0, %s54
      %s57 = sphi 0, %s56
      %s71 = sphi 0, %s57
      %s75 = sphi 0, %s75
      %s77 = sphi 0, %s75
      %s78 = sphi 0, %s77
      %s92 = sphi 0, %s78
      %s96 = sphi 0, %s96
      %s98 = sphi 0, %s96
      %s99 = sphi 0, %s98
      %s113 = sphi 0, %s99
      %s117 = sphi 0, %s117
      %s119 = sphi 0, %s117
      %s120 = sphi 0, %s119
      %s134 = sphi 0, %s120
      %s138 = sphi 0, %s138
      %s140 = sphi 0, %s138
      %s141 = sphi 0, %s140
      %s155 = sphi 0, %s141
      %s161 = sphi 0, %s163
      %s164 = sphi 0, %s161
      %s165 = sphi 0, %s164
      %s181 = sphi 0, %s165
    $region4: #{tpu_custom_call.1} parent=1 // loop_header_branch
      %23 = sbr.rel (%p21) target = $region8
    $region5: #{tpu_custom_call.1} parent=1 // loop_body
      %s25 = ssub.s32 %s20, 1
      %s26 = ssub.s32 %s20, 2
      %s27 = sadd.s32 %s20, 1
      %s28 = ssub.s32 %s20, %s27
      %p29 = scmp.eq.s32.totalorder %s28, 0
      %s31 = sadd.s32 %s30, 1
      %s32 = scalar_select %p29, %s30, %s31
      %p35 = pneg %p29
      %p36 = scmp.eq.s32.totalorder %s20, 1
      %p37 = por %p35, %p36
      %p38 = scmp.ne.s32.totalorder %s30, %s33
      %p39 = scmp.eq.s32.totalorder %s20, 0
      %p40 = por %p38, %p39
      %p41 = scmp.ne.s32.totalorder %s30, %s33
      %p42 = scmp.eq.s32.totalorder %s25, 1
      %p43 = por %p41, %p42
      %p44 = scmp.ne.s32.totalorder %s33, %s34
      %p45 = scmp.eq.s32.totalorder %s25, 0
      %p46 = por %p44, %p45
      %p47 = scmp.ne.s32.totalorder %s33, %s34
      %p48 = scmp.eq.s32.totalorder %s26, 1
      %p49 = por %p47, %p48
      %p51 = scmp.ne.s32.totalorder %s34, %s50
      %p52 = scmp.eq.s32.totalorder %s26, 0
      %p53 = por %p51, %p52
      %s55 = sadd.s32 %s54, 1
      %p58 = scmp.eq.s32.totalorder %s20, 1
      %p59 = scmp.ne.s32.totalorder %s54, %s56
      %p60 = scmp.eq.s32.totalorder %s20, 0
      %p61 = por %p59, %p60
      %p62 = scmp.ne.s32.totalorder %s54, %s56
      %p63 = scmp.eq.s32.totalorder %s25, 1
      %p64 = por %p62, %p63
      %p65 = scmp.ne.s32.totalorder %s56, %s57
      %p66 = scmp.eq.s32.totalorder %s25, 0
      %p67 = por %p65, %p66
      %p68 = scmp.ne.s32.totalorder %s56, %s57
      %p69 = scmp.eq.s32.totalorder %s26, 1
      %p70 = por %p68, %p69
      %p72 = scmp.ne.s32.totalorder %s57, %s71
      %p73 = scmp.eq.s32.totalorder %s26, 0
      %p74 = por %p72, %p73
      %s76 = sadd.s32 %s75, 1
      %p79 = scmp.eq.s32.totalorder %s20, 1
      %p80 = scmp.ne.s32.totalorder %s75, %s77
      %p81 = scmp.eq.s32.totalorder %s20, 0
      %p82 = por %p80, %p81
      %p83 = scmp.ne.s32.totalorder %s75, %s77
      %p84 = scmp.eq.s32.totalorder %s25, 1
      %p85 = por %p83, %p84
      %p86 = scmp.ne.s32.totalorder %s77, %s78
      %p87 = scmp.eq.s32.totalorder %s25, 0
      %p88 = por %p86, %p87
      %p89 = scmp.ne.s32.totalorder %s77, %s78
      %p90 = scmp.eq.s32.totalorder %s26, 1
      %p91 = por %p89, %p90
      %p93 = scmp.ne.s32.totalorder %s78, %s92
      %p94 = scmp.eq.s32.totalorder %s26, 0
      %p95 = por %p93, %p94
      %s97 = sadd.s32 %s96, 1
      %p100 = scmp.eq.s32.totalorder %s20, 1
      %p101 = scmp.ne.s32.totalorder %s96, %s98
      %p102 = scmp.eq.s32.totalorder %s20, 0
      %p103 = por %p101, %p102
      %p104 = scmp.ne.s32.totalorder %s96, %s98
      %p105 = scmp.eq.s32.totalorder %s25, 1
      %p106 = por %p104, %p105
      %p107 = scmp.ne.s32.totalorder %s98, %s99
      %p108 = scmp.eq.s32.totalorder %s25, 0
      %p109 = por %p107, %p108
      %p110 = scmp.ne.s32.totalorder %s98, %s99
      %p111 = scmp.eq.s32.totalorder %s26, 1
      %p112 = por %p110, %p111
      %p114 = scmp.ne.s32.totalorder %s99, %s113
      %p115 = scmp.eq.s32.totalorder %s26, 0
      %p116 = por %p114, %p115
      %s118 = sadd.s32 %s117, 1
      %p121 = scmp.eq.s32.totalorder %s20, 1
      %p122 = scmp.ne.s32.totalorder %s117, %s119
      %p123 = scmp.eq.s32.totalorder %s20, 0
      %p124 = por %p122, %p123
      %p125 = scmp.ne.s32.totalorder %s117, %s119
      %p126 = scmp.eq.s32.totalorder %s25, 1
      %p127 = por %p125, %p126
      %p128 = scmp.ne.s32.totalorder %s119, %s120
      %p129 = scmp.eq.s32.totalorder %s25, 0
      %p130 = por %p128, %p129
      %p131 = scmp.ne.s32.totalorder %s119, %s120
      %p132 = scmp.eq.s32.totalorder %s26, 1
      %p133 = por %p131, %p132
      %p135 = scmp.ne.s32.totalorder %s120, %s134
      %p136 = scmp.eq.s32.totalorder %s26, 0
      %p137 = por %p135, %p136
      %s139 = sadd.s32 %s138, 1
      %p142 = scmp.eq.s32.totalorder %s20, 1
      %p143 = scmp.ne.s32.totalorder %s138, %s140
      %p144 = scmp.eq.s32.totalorder %s20, 0
      %p145 = por %p143, %p144
      %p146 = scmp.ne.s32.totalorder %s138, %s140
      %p147 = scmp.eq.s32.totalorder %s25, 1
      %p148 = por %p146, %p147
      %p149 = scmp.ne.s32.totalorder %s140, %s141
      %p150 = scmp.eq.s32.totalorder %s25, 0
      %p151 = por %p149, %p150
      %p152 = scmp.ne.s32.totalorder %s140, %s141
      %p153 = scmp.eq.s32.totalorder %s26, 1
      %p154 = por %p152, %p153
      %p156 = scmp.ne.s32.totalorder %s141, %s155
      %p157 = scmp.eq.s32.totalorder %s26, 0
      %p158 = por %p156, %p157
      %s159 = ssub.s32 %s20, %s27
      %p160 = scmp.eq.s32.totalorder %s159, 0
      %s162 = sadd.s32 %s161, 1
      %s163 = scalar_select %p160, %s161, %s162
      %p166 = pneg %p160
      %p167 = scmp.eq.s32.totalorder %s20, 1
      %p168 = por %p166, %p167
      %p169 = scmp.ne.s32.totalorder %s161, %s164
      %p170 = scmp.eq.s32.totalorder %s20, 0
      %p171 = por %p169, %p170
      %p172 = scmp.ne.s32.totalorder %s161, %s164
      %p173 = scmp.eq.s32.totalorder %s25, 1
      %p174 = por %p172, %p173
      %p175 = scmp.ne.s32.totalorder %s164, %s165
      %p176 = scmp.eq.s32.totalorder %s25, 0
      %p177 = por %p175, %p176
      %p178 = scmp.ne.s32.totalorder %s164, %s165
      %p179 = scmp.eq.s32.totalorder %s26, 1
      %p180 = por %p178, %p179
      %p182 = scmp.ne.s32.totalorder %s165, %s181
      %p183 = scmp.eq.s32.totalorder %s26, 0
      %p184 = por %p182, %p183
      %p185 = scmp.le.s32.totalorder 1, %s20
      %p186 = scmp.lt.s32.totalorder %s20, 3
      %p187 = pnand %p185, %p186
      %p188 = pneg %p187
      // Predicated region
      $region9: #{tpu_custom_call.1} parent=5 // pred_check
        _
      $region10: #{tpu_custom_call.1} parent=5 // pred_check_branch
        %190 = sbr.rel (%p187) target = $region12
      $region11: #{tpu_custom_call.1} parent=5 // pred_region
        %s191 = ssub.s32 %s20, 1
        // Predicated region
        $region13: #{tpu_custom_call.1} parent=11 // pred_check
          %p192 = pneg %p67
        $region14: #{tpu_custom_call.1} parent=11 // pred_check_branch
          %194 = sbr.rel (%p192) target = $region16
        $region15: #{tpu_custom_call.1} parent=11 // pred_region
          %s196 = ssub.s32 3072, 3072
          %197 = vsyncadd [#allocation6], %s196
          %s198 = sshll.u32 [#allocation5], 4
          %s199 = int_to_ptr.vmem [resolvable:$true] %s198
          %204 = dma.hbm_to_vmem [thread:$0]  %s1, 3072, %s199, [#allocation6], 128, 128, 8
        $region16: #{tpu_custom_call.1} parent=11 // pred_fallthru
          _
        // Predicated region
        $region17: #{tpu_custom_call.1} parent=11 // pred_check
          %p205 = pneg %p88
        $region18: #{tpu_custom_call.1} parent=11 // pred_check_branch
          %207 = sbr.rel (%p205) target = $region20
        $region19: #{tpu_custom_call.1} parent=11 // pred_region
          _
        $region20: #{tpu_custom_call.1} parent=11 // pred_fallthru
          _
        // Predicated region
        $region21: #{tpu_custom_call.1} parent=11 // pred_check
          %p208 = pneg %p109
        $region22: #{tpu_custom_call.1} parent=11 // pred_check_branch
          %210 = sbr.rel (%p208) target = $region24
        $region23: #{tpu_custom_call.1} parent=11 // pred_region
          %s212 = ssub.s32 6144, 6144
          %213 = vsyncadd [#allocation6], %s212
          %s214 = sshll.u32 [#allocation7], 4
          %s215 = int_to_ptr.vmem [resolvable:$true] %s214
          %220 = dma.hbm_to_vmem [thread:$0]  %s3, 6144, %s215, [#allocation6], 128, 128, 8
        $region24: #{tpu_custom_call.1} parent=11 // pred_fallthru
          _
        // Predicated region
        $region25: #{tpu_custom_call.1} parent=11 // pred_check
          %p221 = pneg %p130
        $region26: #{tpu_custom_call.1} parent=11 // pred_check_branch
          %223 = sbr.rel (%p221) target = $region28
        $region27: #{tpu_custom_call.1} parent=11 // pred_region
          _
        $region28: #{tpu_custom_call.1} parent=11 // pred_fallthru
          _
        // Predicated region
        $region29: #{tpu_custom_call.1} parent=11 // pred_check
          %p224 = pneg %p151
        $region30: #{tpu_custom_call.1} parent=11 // pred_check_branch
          %226 = sbr.rel (%p224) target = $region32
        $region31: #{tpu_custom_call.1} parent=11 // pred_region
          %s228 = ssub.s32 1024, 1024
          %229 = vsyncadd [#allocation9], %s228
          %s230 = sshll.u32 [#allocation8], 4
          %s231 = int_to_ptr.vmem [resolvable:$true] %s230
          %236 = dma.hbm_to_vmem [thread:$0]  %s5, 1024, %s231, [#allocation9], 128, 128, 8
        $region32: #{tpu_custom_call.1} parent=11 // pred_fallthru
          _
      $region12: #{tpu_custom_call.1} parent=5 // pred_fallthru
        _
      %p237 = scmp.lt.s32.totalorder %s20, 2
      // Predicated region
      $region33: #{tpu_custom_call.1} parent=5 // pred_check
        %p238 = pneg %p237
      $region34: #{tpu_custom_call.1} parent=5 // pred_check_branch
        %240 = sbr.rel (%p238) target = $region36
      $region35: #{tpu_custom_call.1} parent=5 // pred_region
        // Predicated region
        $region37: #{tpu_custom_call.1} parent=35 // pred_check
          %p241 = pneg %p40
        $region38: #{tpu_custom_call.1} parent=35 // pred_check_branch
          %243 = sbr.rel (%p241) target = $region40
        $region39: #{tpu_custom_call.1} parent=35 // pred_region
          %s244 = sand.u32 %s30, 1
          %s245 = scalar_lea.sflag [#allocation3], %s244
          %s246 = sand.u32 %s30, 1
          %s247 = smul.addr %s246, 16
          %s248 = scalar_lea.vmem [#allocation2], %s247
          %s250 = ssub.s32 256, 256
          %251 = vsyncadd %s245, %s250
          %s252 = smul.addr %s20, 2
          %s253 = smul.addr %s252, 128
          %s254 = scalar_lea.hbm %s0, %s253
          %s255 = sshll.u32 %s248, 4
          %s256 = int_to_ptr.vmem [resolvable:$true] %s255
          %261 = dma.hbm_to_vmem [thread:$0]  %s254, 256, %s256, %s245, 128, 128, 8
        $region40: #{tpu_custom_call.1} parent=35 // pred_fallthru
          _
      $region36: #{tpu_custom_call.1} parent=5 // pred_fallthru
        _
      %p262 = scmp.le.s32.totalorder 1, %s20
      %p263 = scmp.lt.s32.totalorder %s20, 3
      %p264 = pnand %p262, %p263
      %p265 = pneg %p264
      // Predicated region
      $region41: #{tpu_custom_call.1} parent=5 // pred_check
        _
      $region42: #{tpu_custom_call.1} parent=5 // pred_check_branch
        %267 = sbr.rel (%p264) target = $region44
      $region43: #{tpu_custom_call.1} parent=5 // pred_region
        %s268 = ssub.s32 %s20, 1
        %s269 = sand.u32 %s33, 1
        %s270 = scalar_lea.sflag [#allocation3], %s269
        %s271 = sand.u32 %s33, 1
        %s272 = smul.addr %s271, 16
        %s273 = scalar_lea.vmem [#allocation2], %s272
        // Predicated region
        $region45: #{tpu_custom_call.1} parent=43 // pred_check
          %p274 = pneg %p46
        $region46: #{tpu_custom_call.1} parent=43 // pred_check_branch
          %276 = sbr.rel (%p274) target = $region48
        $region47: #{tpu_custom_call.1} parent=43 // pred_region
          %277 = dma.done %s270, 256
        $region48: #{tpu_custom_call.1} parent=43 // pred_fallthru
          _
        // Predicated region
        $region49: #{tpu_custom_call.1} parent=43 // pred_check
          %p278 = pneg %p67
        $region50: #{tpu_custom_call.1} parent=43 // pred_check_branch
          %280 = sbr.rel (%p278) target = $region52
        $region51: #{tpu_custom_call.1} parent=43 // pred_region
          %281 = dma.done [#allocation6], 3072
        $region52: #{tpu_custom_call.1} parent=43 // pred_fallthru
          _
        // Predicated region
        $region53: #{tpu_custom_call.1} parent=43 // pred_check
          %p282 = pneg %p109
        $region54: #{tpu_custom_call.1} parent=43 // pred_check_branch
          %284 = sbr.rel (%p282) target = $region56
        $region55: #{tpu_custom_call.1} parent=43 // pred_region
          %285 = dma.done [#allocation6], 6144
        $region56: #{tpu_custom_call.1} parent=43 // pred_fallthru
          _
        // Predicated region
        $region57: #{tpu_custom_call.1} parent=43 // pred_check
          %p286 = pneg %p151
        $region58: #{tpu_custom_call.1} parent=43 // pred_check_branch
          %288 = sbr.rel (%p286) target = $region60
        $region59: #{tpu_custom_call.1} parent=43 // pred_region
          %289 = dma.done [#allocation9], 1024
        $region60: #{tpu_custom_call.1} parent=43 // pred_fallthru
          _
        %s290 = sand.u32 %s33, 1
        %s291 = scalar_lea.sflag [#allocation3], %s290
        %s292 = sand.u32 %s33, 1
        %s293 = smul.addr %s292, 16
        %s294 = scalar_lea.vmem [#allocation2], %s293
        %p295 = pneg %p46
        %p296 = pneg %p43
        %p297 = pneg %p67
        %p298 = pneg %p64
        %p299 = pneg %p88
        %p300 = pneg %p85
        %p301 = pneg %p109
        %p302 = pneg %p106
        %p303 = pneg %p130
        %p304 = pneg %p127
        %p305 = pneg %p151
        %p306 = pneg %p148
        %p307 = pneg %p177
        %p308 = pneg %p174
        %s309 = sand.u32 %s164, 1
        %s310 = scalar_lea.sflag [#allocation4], %s309
        %s311 = sand.u32 %s164, 1
        %s312 = smul.addr %s311, 16
        %s313 = scalar_lea.vmem [#allocation10], %s312
        %v314 = vld [vmem:[%s273] sm:$0xff]
        %v315 = vld [vmem:[%s273 + $0x8] sm:$0xff]
        %v316 = vld [vmem:[%s2] sm:$0x1]
        %s317 = scalar_lea.vmem [#allocation5], 64
        %v318 = vld [vmem:[%s317] sm:$0xff]
        %v319 = vld [vmem:[%s317 + $0x8] sm:$0xff]
        %v320 = vld [vmem:[%s317 + $0x10] sm:$0xff]
        %v321 = vld [vmem:[%s317 + $0x18] sm:$0xff]
        %v322 = vld [vmem:[%s317 + $0x20] sm:$0xff]
        %v323 = vld [vmem:[%s317 + $0x28] sm:$0xff]
        %v324 = vld [vmem:[%s317 + $0x30] sm:$0xff]
        %v325 = vld [vmem:[%s317 + $0x38] sm:$0xff]
        %v326 = vld [vmem:[#allocation5] sm:$0xff]
        %v327 = vld [vmem:[#allocation5 + $0x8] sm:$0xff]
        %v328 = vld [vmem:[#allocation5 + $0x10] sm:$0xff]
        %v329 = vld [vmem:[#allocation5 + $0x18] sm:$0xff]
        %v330 = vld [vmem:[#allocation5 + $0x20] sm:$0xff]
        %v331 = vld [vmem:[#allocation5 + $0x28] sm:$0xff]
        %v332 = vld [vmem:[#allocation5 + $0x30] sm:$0xff]
        %v333 = vld [vmem:[#allocation5 + $0x38] sm:$0xff]
        %vm334 = vcmask 523264
        %v336 = vsel %vm334, %v314, 0
        %v339 = vsel %vm334, %v315, 0
        %341 = vmatprep.subr.mxu0 0.0
        %342 = vmatpush1.msra.mxu0 0.0
        %343 = vmatprep.subr.mxu0 0.0
        %344 = vmatpush1.msra.mxu0 0.0
        %345 = vmatprep.subr.mxu0 0.0
        %346 = vmatpush1.msra.mxu0 0.0
        %347 = vmatprep.subr.mxu0 0.0
        %348 = vmatpush1.msra.mxu0 0.0
        %349 = vmatprep.subr.mxu0 0.0
        %350 = vmatpush1.msra.mxu0 0.0
        %351 = vmatprep.subr.mxu0 0.0
        %352 = vmatpush1.msra.mxu0 0.0
        %353 = vmatprep.subr.mxu0 0.0
        %354 = vmatpush1.msra.mxu0 0.0
        %355 = vmatprep.subr.mxu0 0.0
        %356 = vmatpush1.msra.mxu0 0.0
        %357 = vmatprep.subr.mxu0 0.0
        %358 = vmatpush1.msra.mxu0 %v333
        %359 = vmatprep.subr.mxu0 0.0
        %360 = vmatpush1.msra.mxu0 %v332
        %361 = vmatprep.subr.mxu0 0.0
        %362 = vmatpush1.msra.mxu0 %v331
        %363 = vmatprep.subr.mxu0 0.0
        %364 = vmatpush1.msra.mxu0 %v330
        %365 = vmatprep.subr.mxu0 0.0
        %366 = vmatpush1.msra.mxu0 %v329
        %367 = vmatprep.subr.mxu0 0.0
        %368 = vmatpush1.msra.mxu0 %v328
        %369 = vmatprep.subr.mxu0 0.0
        %370 = vmatpush1.msra.mxu0 %v327
        %371 = vmatprep.subr.mxu0 0.0
        %372 = vmatpush1.msra.mxu0 %v326
        %373 = vmatprep.subr.mxu0 0.0
        %374 = vmatpush2.msra.mxu0 0.0
        %375 = vmatprep.subr.mxu0 0.0
        %376 = vmatpush2.msra.mxu0 0.0
        %377 = vmatprep.subr.mxu0 0.0
        %378 = vmatpush2.msra.mxu0 0.0
        %379 = vmatprep.subr.mxu0 0.0
        %380 = vmatpush2.msra.mxu0 0.0
        %381 = vmatprep.subr.mxu0 0.0
        %382 = vmatpush2.msra.mxu0 0.0
        %383 = vmatprep.subr.mxu0 0.0
        %384 = vmatpush2.msra.mxu0 0.0
        %385 = vmatprep.subr.mxu0 0.0
        %386 = vmatpush2.msra.mxu0 0.0
        %387 = vmatprep.subr.mxu0 0.0
        %388 = vmatpush2.msra.mxu0 0.0
        %389 = vmatprep.subr.mxu0 0.0
        %390 = vmatpush2.msra.mxu0 0.0
        %391 = vmatprep.subr.mxu0 0.0
        %392 = vmatpush2.msra.mxu0 0.0
        %393 = vmatprep.subr.mxu0 0.0
        %394 = vmatpush2.msra.mxu0 0.0
        %395 = vmatprep.subr.mxu0 0.0
        %396 = vmatpush2.msra.mxu0 0.0
        %397 = vmatprep.subr.mxu0 0.0
        %398 = vmatpush2.msra.mxu0 0.0
        %399 = vmatprep.subr.mxu0 0.0
        %400 = vmatpush2.msra.mxu0 0.0
        %401 = vmatprep.subr.mxu0 0.0
        %402 = vmatpush2.msra.mxu0 0.0
        %403 = vmatprep.subr.mxu0 0.0
        %404 = vmatpush2.msra.mxu0 0.0
        %405 = vmatprep.mubr.f32.mxu0 0.0
        %406 = vmatmul.mubr.f32.gmra.mxu0 %v336
        %v407 = vpop.f32.mrf.mxu0
        %v408 = vadd.f32 0.0, %v407
        %v409 = vpop.f32.mrf.mxu0
        %410 = vmatprep.mubr.f32.mxu0 0.0
        %411 = vmatmul.mubr.f32.gmra.mxu0 %v339
        %v412 = vpop.f32.mrf.mxu0
        %v413 = vadd.f32 0.0, %v412
        %v414 = vpop.f32.mrf.mxu0
        %415 = vdwg.mxu0
        %s416 = scalar_lea.vmem [#allocation5], 128
        %v417 = vld [vmem:[%s416] sm:$0xff]
        %v418 = vld [vmem:[%s416 + $0x8] sm:$0xff]
        %v419 = vld [vmem:[%s416 + $0x10] sm:$0xff]
        %v420 = vld [vmem:[%s416 + $0x18] sm:$0xff]
        %v421 = vld [vmem:[%s416 + $0x20] sm:$0xff]
        %v422 = vld [vmem:[%s416 + $0x28] sm:$0xff]
        %v423 = vld [vmem:[%s416 + $0x30] sm:$0xff]
        %v424 = vld [vmem:[%s416 + $0x38] sm:$0xff]
        %vm425 = vcmask 1046528
        %v426 = vrot.slane %v314, 1
        %v427 = vrot.slane %v315, 1
        %v428 = vsel %vm425, %v426, %v427
        %v429 = vsel %vm334, %v428, 0
        %v431 = vsel %vm334, %v427, 0
        %433 = vmatprep.subr.mxu0 0.0
        %434 = vmatpush1.msra.mxu0 0.0
        %435 = vmatprep.subr.mxu0 0.0
        %436 = vmatpush1.msra.mxu0 0.0
        %437 = vmatprep.subr.mxu0 0.0
        %438 = vmatpush1.msra.mxu0 0.0
        %439 = vmatprep.subr.mxu0 0.0
        %440 = vmatpush1.msra.mxu0 0.0
        %441 = vmatprep.subr.mxu0 0.0
        %442 = vmatpush1.msra.mxu0 0.0
        %443 = vmatprep.subr.mxu0 0.0
        %444 = vmatpush1.msra.mxu0 0.0
        %445 = vmatprep.subr.mxu0 0.0
        %446 = vmatpush1.msra.mxu0 0.0
        %447 = vmatprep.subr.mxu0 0.0
        %448 = vmatpush1.msra.mxu0 0.0
        %449 = vmatprep.subr.mxu0 0.0
        %450 = vmatpush1.msra.mxu0 %v424
        %451 = vmatprep.subr.mxu0 0.0
        %452 = vmatpush1.msra.mxu0 %v423
        %453 = vmatprep.subr.mxu0 0.0
        %454 = vmatpush1.msra.mxu0 %v422
        %455 = vmatprep.subr.mxu0 0.0
        %456 = vmatpush1.msra.mxu0 %v421
        %457 = vmatprep.subr.mxu0 0.0
        %458 = vmatpush1.msra.mxu0 %v420
        %459 = vmatprep.subr.mxu0 0.0
        %460 = vmatpush1.msra.mxu0 %v419
        %461 = vmatprep.subr.mxu0 0.0
        %462 = vmatpush1.msra.mxu0 %v418
        %463 = vmatprep.subr.mxu0 0.0
        %464 = vmatpush1.msra.mxu0 %v417
        %465 = vmatprep.subr.mxu0 0.0
        %466 = vmatpush2.msra.mxu0 0.0
        %467 = vmatprep.subr.mxu0 0.0
        %468 = vmatpush2.msra.mxu0 0.0
        %469 = vmatprep.subr.mxu0 0.0
        %470 = vmatpush2.msra.mxu0 0.0
        %471 = vmatprep.subr.mxu0 0.0
        %472 = vmatpush2.msra.mxu0 0.0
        %473 = vmatprep.subr.mxu0 0.0
        %474 = vmatpush2.msra.mxu0 0.0
        %475 = vmatprep.subr.mxu0 0.0
        %476 = vmatpush2.msra.mxu0 0.0
        %477 = vmatprep.subr.mxu0 0.0
        %478 = vmatpush2.msra.mxu0 0.0
        %479 = vmatprep.subr.mxu0 0.0
        %480 = vmatpush2.msra.mxu0 0.0
        %481 = vmatprep.subr.mxu0 0.0
        %482 = vmatpush2.msra.mxu0 0.0
        %483 = vmatprep.subr.mxu0 0.0
        %484 = vmatpush2.msra.mxu0 0.0
        %485 = vmatprep.subr.mxu0 0.0
        %486 = vmatpush2.msra.mxu0 0.0
        %487 = vmatprep.subr.mxu0 0.0
        %488 = vmatpush2.msra.mxu0 0.0
        %489 = vmatprep.subr.mxu0 0.0
        %490 = vmatpush2.msra.mxu0 0.0
        %491 = vmatprep.subr.mxu0 0.0
        %492 = vmatpush2.msra.mxu0 0.0
        %493 = vmatprep.subr.mxu0 0.0
        %494 = vmatpush2.msra.mxu0 0.0
        %495 = vmatprep.subr.mxu0 0.0
        %496 = vmatpush2.msra.mxu0 0.0
        %497 = vmatprep.mubr.f32.mxu0 0.0
        %498 = vmatmul.mubr.f32.gmra.mxu0 %v429
        %v499 = vpop.f32.mrf.mxu0
        %v500 = vadd.f32 0.0, %v499
        %v501 = vpop.f32.mrf.mxu0
        %502 = vmatprep.mubr.f32.mxu0 0.0
        %503 = vmatmul.mubr.f32.gmra.mxu0 %v431
        %v504 = vpop.f32.mrf.mxu0
        %v505 = vadd.f32 0.0, %v504
        %v506 = vpop.f32.mrf.mxu0
        %507 = vdwg.mxu0
        %vm510 = vcmask 1040384
        %v511 = vrot.slane %v408, 7
        %v512 = vrot.slane %v413, 7
        %v513 = vsel %vm510, %v511, %v512
        %v516 = vsel %vm510, 0.0, %v511
        %517 = vmatprep.subr.mxu0 0.0
        %518 = vmatpush1.msra.mxu0 0.0
        %519 = vmatprep.subr.mxu0 0.0
        %520 = vmatpush1.msra.mxu0 0.0
        %521 = vmatprep.subr.mxu0 0.0
        %522 = vmatpush1.msra.mxu0 0.0
        %523 = vmatprep.subr.mxu0 0.0
        %524 = vmatpush1.msra.mxu0 0.0
        %525 = vmatprep.subr.mxu0 0.0
        %526 = vmatpush1.msra.mxu0 0.0
        %527 = vmatprep.subr.mxu0 0.0
        %528 = vmatpush1.msra.mxu0 0.0
        %529 = vmatprep.subr.mxu0 0.0
        %530 = vmatpush1.msra.mxu0 0.0
        %531 = vmatprep.subr.mxu0 0.0
        %532 = vmatpush1.msra.mxu0 0.0
        %533 = vmatprep.subr.mxu0 0.0
        %534 = vmatpush1.msra.mxu0 %v325
        %535 = vmatprep.subr.mxu0 0.0
        %536 = vmatpush1.msra.mxu0 %v324
        %537 = vmatprep.subr.mxu0 0.0
        %538 = vmatpush1.msra.mxu0 %v323
        %539 = vmatprep.subr.mxu0 0.0
        %540 = vmatpush1.msra.mxu0 %v322
        %541 = vmatprep.subr.mxu0 0.0
        %542 = vmatpush1.msra.mxu0 %v321
        %543 = vmatprep.subr.mxu0 0.0
        %544 = vmatpush1.msra.mxu0 %v320
        %545 = vmatprep.subr.mxu0 0.0
        %546 = vmatpush1.msra.mxu0 %v319
        %547 = vmatprep.subr.mxu0 0.0
        %548 = vmatpush1.msra.mxu0 %v318
        %549 = vmatprep.subr.mxu0 0.0
        %550 = vmatpush2.msra.mxu0 0.0
        %551 = vmatprep.subr.mxu0 0.0
        %552 = vmatpush2.msra.mxu0 0.0
        %553 = vmatprep.subr.mxu0 0.0
        %554 = vmatpush2.msra.mxu0 0.0
        %555 = vmatprep.subr.mxu0 0.0
        %556 = vmatpush2.msra.mxu0 0.0
        %557 = vmatprep.subr.mxu0 0.0
        %558 = vmatpush2.msra.mxu0 0.0
        %559 = vmatprep.subr.mxu0 0.0
        %560 = vmatpush2.msra.mxu0 0.0
        %561 = vmatprep.subr.mxu0 0.0
        %562 = vmatpush2.msra.mxu0 0.0
        %563 = vmatprep.subr.mxu0 0.0
        %564 = vmatpush2.msra.mxu0 0.0
        %565 = vmatprep.subr.mxu0 0.0
        %566 = vmatpush2.msra.mxu0 0.0
        %567 = vmatprep.subr.mxu0 0.0
        %568 = vmatpush2.msra.mxu0 0.0
        %569 = vmatprep.subr.mxu0 0.0
        %570 = vmatpush2.msra.mxu0 0.0
        %571 = vmatprep.subr.mxu0 0.0
        %572 = vmatpush2.msra.mxu0 0.0
        %573 = vmatprep.subr.mxu0 0.0
        %574 = vmatpush2.msra.mxu0 0.0
        %575 = vmatprep.subr.mxu0 0.0
        %576 = vmatpush2.msra.mxu0 0.0
        %577 = vmatprep.subr.mxu0 0.0
        %578 = vmatpush2.msra.mxu0 0.0
        %579 = vmatprep.subr.mxu0 0.0
        %580 = vmatpush2.msra.mxu0 0.0
        %581 = vmatprep.mubr.f32.mxu0 0.0
        %582 = vmatmul.mubr.f32.gmra.mxu0 %v336
        %v583 = vpop.f32.mrf.mxu0
        %v584 = vadd.f32 %v516, %v583
        %v585 = vpop.f32.mrf.mxu0
        %586 = vmatprep.mubr.f32.mxu0 0.0
        %587 = vmatmul.mubr.f32.gmra.mxu0 %v339
        %v588 = vpop.f32.mrf.mxu0
        %v589 = vadd.f32 %v513, %v588
        %v590 = vpop.f32.mrf.mxu0
        %591 = vdwg.mxu0
        %v592 = vsel %vm425, %v505, 0.0
        %v593 = vadd.f32 %v584, %v500
        %v594 = vadd.f32 %v589, %v592
        %v596 = vlaneseq
        %v597 = vshrl.u32 %v596, 7
        %v598 = vsub.s32 0, %v597
        %v599 = vrot.slane %v316, %v598
        %v601 = vadd.f32 %v593, %v599
        %v602 = vadd.f32 %v594, %v599
        %v603 = vmax.f32 %v601, 0.0
        %v604 = vmax.f32 %v602, 0.0
        %v605 = vld [vmem:[%s4] sm:$0x1]
        %s606 = scalar_lea.vmem [#allocation7], 128
        %v607 = vld [vmem:[%s606] sm:$0xff]
        %v608 = vld [vmem:[%s606 + $0x8] sm:$0xff]
        %v609 = vld [vmem:[%s606 + $0x10] sm:$0xff]
        %v610 = vld [vmem:[%s606 + $0x18] sm:$0xff]
        %v611 = vld [vmem:[%s606 + $0x20] sm:$0xff]
        %v612 = vld [vmem:[%s606 + $0x28] sm:$0xff]
        %v613 = vld [vmem:[%s606 + $0x30] sm:$0xff]
        %v614 = vld [vmem:[%s606 + $0x38] sm:$0xff]
        %v615 = vld [vmem:[%s606 + $0x40] sm:$0xff]
        %v616 = vld [vmem:[%s606 + $0x48] sm:$0xff]
        %v617 = vld [vmem:[%s606 + $0x50] sm:$0xff]
        %v618 = vld [vmem:[%s606 + $0x58] sm:$0xff]
        %v619 = vld [vmem:[%s606 + $0x60] sm:$0xff]
        %v620 = vld [vmem:[%s606 + $0x68] sm:$0xff]
        %v621 = vld [vmem:[%s606 + $0x70] sm:$0xff]
        %v622 = vld [vmem:[%s606 + $0x78] sm:$0xff]
        %v623 = vld [vmem:[#allocation7] sm:$0xff]
        %v624 = vld [vmem:[#allocation7 + $0x8] sm:$0xff]
        %v625 = vld [vmem:[#allocation7 + $0x10] sm:$0xff]
        %v626 = vld [vmem:[#allocation7 + $0x18] sm:$0xff]
        %v627 = vld [vmem:[#allocation7 + $0x20] sm:$0xff]
        %v628 = vld [vmem:[#allocation7 + $0x28] sm:$0xff]
        %v629 = vld [vmem:[#allocation7 + $0x30] sm:$0xff]
        %v630 = vld [vmem:[#allocation7 + $0x38] sm:$0xff]
        %v631 = vld [vmem:[#allocation7 + $0x40] sm:$0xff]
        %v632 = vld [vmem:[#allocation7 + $0x48] sm:$0xff]
        %v633 = vld [vmem:[#allocation7 + $0x50] sm:$0xff]
        %v634 = vld [vmem:[#allocation7 + $0x58] sm:$0xff]
        %v635 = vld [vmem:[#allocation7 + $0x60] sm:$0xff]
        %v636 = vld [vmem:[#allocation7 + $0x68] sm:$0xff]
        %v637 = vld [vmem:[#allocation7 + $0x70] sm:$0xff]
        %v638 = vld [vmem:[#allocation7 + $0x78] sm:$0xff]
        %639 = vmatprep.subr.mxu0 0.0
        %640 = vmatpush1.msra.mxu0 %v638
        %641 = vmatprep.subr.mxu0 0.0
        %642 = vmatpush1.msra.mxu0 %v637
        %643 = vmatprep.subr.mxu0 0.0
        %644 = vmatpush1.msra.mxu0 %v636
        %645 = vmatprep.subr.mxu0 0.0
        %646 = vmatpush1.msra.mxu0 %v635
        %647 = vmatprep.subr.mxu0 0.0
        %648 = vmatpush1.msra.mxu0 %v634
        %649 = vmatprep.subr.mxu0 0.0
        %650 = vmatpush1.msra.mxu0 %v633
        %651 = vmatprep.subr.mxu0 0.0
        %652 = vmatpush1.msra.mxu0 %v632
        %653 = vmatprep.subr.mxu0 0.0
        %654 = vmatpush1.msra.mxu0 %v631
        %655 = vmatprep.subr.mxu0 0.0
        %656 = vmatpush1.msra.mxu0 %v630
        %657 = vmatprep.subr.mxu0 0.0
        %658 = vmatpush1.msra.mxu0 %v629
        %659 = vmatprep.subr.mxu0 0.0
        %660 = vmatpush1.msra.mxu0 %v628
        %661 = vmatprep.subr.mxu0 0.0
        %662 = vmatpush1.msra.mxu0 %v627
        %663 = vmatprep.subr.mxu0 0.0
        %664 = vmatpush1.msra.mxu0 %v626
        %665 = vmatprep.subr.mxu0 0.0
        %666 = vmatpush1.msra.mxu0 %v625
        %667 = vmatprep.subr.mxu0 0.0
        %668 = vmatpush1.msra.mxu0 %v624
        %669 = vmatprep.subr.mxu0 0.0
        %670 = vmatpush1.msra.mxu0 %v623
        %671 = vmatprep.subr.mxu0 0.0
        %672 = vmatpush2.msra.mxu0 0.0
        %673 = vmatprep.subr.mxu0 0.0
        %674 = vmatpush2.msra.mxu0 0.0
        %675 = vmatprep.subr.mxu0 0.0
        %676 = vmatpush2.msra.mxu0 0.0
        %677 = vmatprep.subr.mxu0 0.0
        %678 = vmatpush2.msra.mxu0 0.0
        %679 = vmatprep.subr.mxu0 0.0
        %680 = vmatpush2.msra.mxu0 0.0
        %681 = vmatprep.subr.mxu0 0.0
        %682 = vmatpush2.msra.mxu0 0.0
        %683 = vmatprep.subr.mxu0 0.0
        %684 = vmatpush2.msra.mxu0 0.0
        %685 = vmatprep.subr.mxu0 0.0
        %686 = vmatpush2.msra.mxu0 0.0
        %687 = vmatprep.subr.mxu0 0.0
        %688 = vmatpush2.msra.mxu0 0.0
        %689 = vmatprep.subr.mxu0 0.0
        %690 = vmatpush2.msra.mxu0 0.0
        %691 = vmatprep.subr.mxu0 0.0
        %692 = vmatpush2.msra.mxu0 0.0
        %693 = vmatprep.subr.mxu0 0.0
        %694 = vmatpush2.msra.mxu0 0.0
        %695 = vmatprep.subr.mxu0 0.0
        %696 = vmatpush2.msra.mxu0 0.0
        %697 = vmatprep.subr.mxu0 0.0
        %698 = vmatpush2.msra.mxu0 0.0
        %699 = vmatprep.subr.mxu0 0.0
        %700 = vmatpush2.msra.mxu0 0.0
        %701 = vmatprep.subr.mxu0 0.0
        %702 = vmatpush2.msra.mxu0 0.0
        %703 = vmatprep.mubr.f32.mxu0 0.0
        %704 = vmatmul.mubr.f32.gmra.mxu0 %v603
        %v705 = vpop.f32.mrf.mxu0
        %v706 = vadd.f32 0.0, %v705
        %v707 = vpop.f32.mrf.mxu0
        %708 = vmatprep.mubr.f32.mxu0 0.0
        %709 = vmatmul.mubr.f32.gmra.mxu0 %v604
        %v710 = vpop.f32.mrf.mxu0
        %v711 = vadd.f32 0.0, %v710
        %v712 = vpop.f32.mrf.mxu0
        %713 = vdwg.mxu0
        %s714 = scalar_lea.vmem [#allocation7], 256
        %v715 = vld [vmem:[%s714] sm:$0xff]
        %v716 = vld [vmem:[%s714 + $0x8] sm:$0xff]
        %v717 = vld [vmem:[%s714 + $0x10] sm:$0xff]
        %v718 = vld [vmem:[%s714 + $0x18] sm:$0xff]
        %v719 = vld [vmem:[%s714 + $0x20] sm:$0xff]
        %v720 = vld [vmem:[%s714 + $0x28] sm:$0xff]
        %v721 = vld [vmem:[%s714 + $0x30] sm:$0xff]
        %v722 = vld [vmem:[%s714 + $0x38] sm:$0xff]
        %v723 = vld [vmem:[%s714 + $0x40] sm:$0xff]
        %v724 = vld [vmem:[%s714 + $0x48] sm:$0xff]
        %v725 = vld [vmem:[%s714 + $0x50] sm:$0xff]
        %v726 = vld [vmem:[%s714 + $0x58] sm:$0xff]
        %v727 = vld [vmem:[%s714 + $0x60] sm:$0xff]
        %v728 = vld [vmem:[%s714 + $0x68] sm:$0xff]
        %v729 = vld [vmem:[%s714 + $0x70] sm:$0xff]
        %v730 = vld [vmem:[%s714 + $0x78] sm:$0xff]
        %v733 = vrot.slane %v603, 1
        %v734 = vrot.slane %v604, 1
        %v735 = vsel %vm425, %v733, %v734
        %738 = vmatprep.subr.mxu0 0.0
        %739 = vmatpush1.msra.mxu0 %v730
        %740 = vmatprep.subr.mxu0 0.0
        %741 = vmatpush1.msra.mxu0 %v729
        %742 = vmatprep.subr.mxu0 0.0
        %743 = vmatpush1.msra.mxu0 %v728
        %744 = vmatprep.subr.mxu0 0.0
        %745 = vmatpush1.msra.mxu0 %v727
        %746 = vmatprep.subr.mxu0 0.0
        %747 = vmatpush1.msra.mxu0 %v726
        %748 = vmatprep.subr.mxu0 0.0
        %749 = vmatpush1.msra.mxu0 %v725
        %750 = vmatprep.subr.mxu0 0.0
        %751 = vmatpush1.msra.mxu0 %v724
        %752 = vmatprep.subr.mxu0 0.0
        %753 = vmatpush1.msra.mxu0 %v723
        %754 = vmatprep.subr.mxu0 0.0
        %755 = vmatpush1.msra.mxu0 %v722
        %756 = vmatprep.subr.mxu0 0.0
        %757 = vmatpush1.msra.mxu0 %v721
        %758 = vmatprep.subr.mxu0 0.0
        %759 = vmatpush1.msra.mxu0 %v720
        %760 = vmatprep.subr.mxu0 0.0
        %761 = vmatpush1.msra.mxu0 %v719
        %762 = vmatprep.subr.mxu0 0.0
        %763 = vmatpush1.msra.mxu0 %v718
        %764 = vmatprep.subr.mxu0 0.0
        %765 = vmatpush1.msra.mxu0 %v717
        %766 = vmatprep.subr.mxu0 0.0
        %767 = vmatpush1.msra.mxu0 %v716
        %768 = vmatprep.subr.mxu0 0.0
        %769 = vmatpush1.msra.mxu0 %v715
        %770 = vmatprep.subr.mxu0 0.0
        %771 = vmatpush2.msra.mxu0 0.0
        %772 = vmatprep.subr.mxu0 0.0
        %773 = vmatpush2.msra.mxu0 0.0
        %774 = vmatprep.subr.mxu0 0.0
        %775 = vmatpush2.msra.mxu0 0.0
        %776 = vmatprep.subr.mxu0 0.0
        %777 = vmatpush2.msra.mxu0 0.0
        %778 = vmatprep.subr.mxu0 0.0
        %779 = vmatpush2.msra.mxu0 0.0
        %780 = vmatprep.subr.mxu0 0.0
        %781 = vmatpush2.msra.mxu0 0.0
        %782 = vmatprep.subr.mxu0 0.0
        %783 = vmatpush2.msra.mxu0 0.0
        %784 = vmatprep.subr.mxu0 0.0
        %785 = vmatpush2.msra.mxu0 0.0
        %786 = vmatprep.subr.mxu0 0.0
        %787 = vmatpush2.msra.mxu0 0.0
        %788 = vmatprep.subr.mxu0 0.0
        %789 = vmatpush2.msra.mxu0 0.0
        %790 = vmatprep.subr.mxu0 0.0
        %791 = vmatpush2.msra.mxu0 0.0
        %792 = vmatprep.subr.mxu0 0.0
        %793 = vmatpush2.msra.mxu0 0.0
        %794 = vmatprep.subr.mxu0 0.0
        %795 = vmatpush2.msra.mxu0 0.0
        %796 = vmatprep.subr.mxu0 0.0
        %797 = vmatpush2.msra.mxu0 0.0
        %798 = vmatprep.subr.mxu0 0.0
        %799 = vmatpush2.msra.mxu0 0.0
        %800 = vmatprep.subr.mxu0 0.0
        %801 = vmatpush2.msra.mxu0 0.0
        %802 = vmatprep.mubr.f32.mxu0 0.0
        %803 = vmatmul.mubr.f32.gmra.mxu0 %v735
        %v804 = vpop.f32.mrf.mxu0
        %v805 = vadd.f32 0.0, %v804
        %v806 = vpop.f32.mrf.mxu0
        %807 = vmatprep.mubr.f32.mxu0 0.0
        %808 = vmatmul.mubr.f32.gmra.mxu0 %v734
        %v809 = vpop.f32.mrf.mxu0
        %v810 = vadd.f32 0.0, %v809
        %v811 = vpop.f32.mrf.mxu0
        %812 = vdwg.mxu0
        %v815 = vrot.slane %v706, 7
        %v816 = vrot.slane %v711, 7
        %v817 = vsel %vm510, %v815, %v816
        %v820 = vsel %vm510, 0.0, %v815
        %821 = vmatprep.subr.mxu0 0.0
        %822 = vmatpush1.msra.mxu0 %v622
        %823 = vmatprep.subr.mxu0 0.0
        %824 = vmatpush1.msra.mxu0 %v621
        %825 = vmatprep.subr.mxu0 0.0
        %826 = vmatpush1.msra.mxu0 %v620
        %827 = vmatprep.subr.mxu0 0.0
        %828 = vmatpush1.msra.mxu0 %v619
        %829 = vmatprep.subr.mxu0 0.0
        %830 = vmatpush1.msra.mxu0 %v618
        %831 = vmatprep.subr.mxu0 0.0
        %832 = vmatpush1.msra.mxu0 %v617
        %833 = vmatprep.subr.mxu0 0.0
        %834 = vmatpush1.msra.mxu0 %v616
        %835 = vmatprep.subr.mxu0 0.0
        %836 = vmatpush1.msra.mxu0 %v615
        %837 = vmatprep.subr.mxu0 0.0
        %838 = vmatpush1.msra.mxu0 %v614
        %839 = vmatprep.subr.mxu0 0.0
        %840 = vmatpush1.msra.mxu0 %v613
        %841 = vmatprep.subr.mxu0 0.0
        %842 = vmatpush1.msra.mxu0 %v612
        %843 = vmatprep.subr.mxu0 0.0
        %844 = vmatpush1.msra.mxu0 %v611
        %845 = vmatprep.subr.mxu0 0.0
        %846 = vmatpush1.msra.mxu0 %v610
        %847 = vmatprep.subr.mxu0 0.0
        %848 = vmatpush1.msra.mxu0 %v609
        %849 = vmatprep.subr.mxu0 0.0
        %850 = vmatpush1.msra.mxu0 %v608
        %851 = vmatprep.subr.mxu0 0.0
        %852 = vmatpush1.msra.mxu0 %v607
        %853 = vmatprep.subr.mxu0 0.0
        %854 = vmatpush2.msra.mxu0 0.0
        %855 = vmatprep.subr.mxu0 0.0
        %856 = vmatpush2.msra.mxu0 0.0
        %857 = vmatprep.subr.mxu0 0.0
        %858 = vmatpush2.msra.mxu0 0.0
        %859 = vmatprep.subr.mxu0 0.0
        %860 = vmatpush2.msra.mxu0 0.0
        %861 = vmatprep.subr.mxu0 0.0
        %862 = vmatpush2.msra.mxu0 0.0
        %863 = vmatprep.subr.mxu0 0.0
        %864 = vmatpush2.msra.mxu0 0.0
        %865 = vmatprep.subr.mxu0 0.0
        %866 = vmatpush2.msra.mxu0 0.0
        %867 = vmatprep.subr.mxu0 0.0
        %868 = vmatpush2.msra.mxu0 0.0
        %869 = vmatprep.subr.mxu0 0.0
        %870 = vmatpush2.msra.mxu0 0.0
        %871 = vmatprep.subr.mxu0 0.0
        %872 = vmatpush2.msra.mxu0 0.0
        %873 = vmatprep.subr.mxu0 0.0
        %874 = vmatpush2.msra.mxu0 0.0
        %875 = vmatprep.subr.mxu0 0.0
        %876 = vmatpush2.msra.mxu0 0.0
        %877 = vmatprep.subr.mxu0 0.0
        %878 = vmatpush2.msra.mxu0 0.0
        %879 = vmatprep.subr.mxu0 0.0
        %880 = vmatpush2.msra.mxu0 0.0
        %881 = vmatprep.subr.mxu0 0.0
        %882 = vmatpush2.msra.mxu0 0.0
        %883 = vmatprep.subr.mxu0 0.0
        %884 = vmatpush2.msra.mxu0 0.0
        %885 = vmatprep.mubr.f32.mxu0 0.0
        %886 = vmatmul.mubr.f32.gmra.mxu0 %v603
        %v887 = vpop.f32.mrf.mxu0
        %v888 = vadd.f32 %v820, %v887
        %v889 = vpop.f32.mrf.mxu0
        %890 = vmatprep.mubr.f32.mxu0 0.0
        %891 = vmatmul.mubr.f32.gmra.mxu0 %v604
        %v892 = vpop.f32.mrf.mxu0
        %v893 = vadd.f32 %v817, %v892
        %v894 = vpop.f32.mrf.mxu0
        %895 = vdwg.mxu0
        %v896 = vsel %vm425, %v810, 0.0
        %v897 = vadd.f32 %v888, %v805
        %v898 = vadd.f32 %v893, %v896
        %v900 = vlaneseq
        %v901 = vshrl.u32 %v900, 7
        %v902 = vsub.s32 0, %v901
        %v903 = vrot.slane %v605, %v902
        %v905 = vadd.f32 %v897, %v903
        %v906 = vadd.f32 %v898, %v903
        %v907 = vld [vmem:[#allocation8] sm:$0xff]
        %v908 = vld [vmem:[#allocation8 + $0x8] sm:$0xff]
        %v909 = vld [vmem:[#allocation8 + $0x10] sm:$0xff]
        %v910 = vld [vmem:[#allocation8 + $0x18] sm:$0xff]
        %v911 = vld [vmem:[#allocation8 + $0x20] sm:$0xff]
        %v912 = vld [vmem:[#allocation8 + $0x28] sm:$0xff]
        %v913 = vld [vmem:[#allocation8 + $0x30] sm:$0xff]
        %v914 = vld [vmem:[#allocation8 + $0x38] sm:$0xff]
        %915 = vmatprep.subr.mxu0 0.0
        %916 = vmatpush1.msra.mxu0 0.0
        %917 = vmatprep.subr.mxu0 0.0
        %918 = vmatpush1.msra.mxu0 0.0
        %919 = vmatprep.subr.mxu0 0.0
        %920 = vmatpush1.msra.mxu0 0.0
        %921 = vmatprep.subr.mxu0 0.0
        %922 = vmatpush1.msra.mxu0 0.0
        %923 = vmatprep.subr.mxu0 0.0
        %924 = vmatpush1.msra.mxu0 0.0
        %925 = vmatprep.subr.mxu0 0.0
        %926 = vmatpush1.msra.mxu0 0.0
        %927 = vmatprep.subr.mxu0 0.0
        %928 = vmatpush1.msra.mxu0 0.0
        %929 = vmatprep.subr.mxu0 0.0
        %930 = vmatpush1.msra.mxu0 0.0
        %931 = vmatprep.subr.mxu0 0.0
        %932 = vmatpush1.msra.mxu0 %v914
        %933 = vmatprep.subr.mxu0 0.0
        %934 = vmatpush1.msra.mxu0 %v913
        %935 = vmatprep.subr.mxu0 0.0
        %936 = vmatpush1.msra.mxu0 %v912
        %937 = vmatprep.subr.mxu0 0.0
        %938 = vmatpush1.msra.mxu0 %v911
        %939 = vmatprep.subr.mxu0 0.0
        %940 = vmatpush1.msra.mxu0 %v910
        %941 = vmatprep.subr.mxu0 0.0
        %942 = vmatpush1.msra.mxu0 %v909
        %943 = vmatprep.subr.mxu0 0.0
        %944 = vmatpush1.msra.mxu0 %v908
        %945 = vmatprep.subr.mxu0 0.0
        %946 = vmatpush1.msra.mxu0 %v907
        %947 = vmatprep.subr.mxu0 0.0
        %948 = vmatpush2.msra.mxu0 0.0
        %949 = vmatprep.subr.mxu0 0.0
        %950 = vmatpush2.msra.mxu0 0.0
        %951 = vmatprep.subr.mxu0 0.0
        %952 = vmatpush2.msra.mxu0 0.0
        %953 = vmatprep.subr.mxu0 0.0
        %954 = vmatpush2.msra.mxu0 0.0
        %955 = vmatprep.subr.mxu0 0.0
        %956 = vmatpush2.msra.mxu0 0.0
        %957 = vmatprep.subr.mxu0 0.0
        %958 = vmatpush2.msra.mxu0 0.0
        %959 = vmatprep.subr.mxu0 0.0
        %960 = vmatpush2.msra.mxu0 0.0
        %961 = vmatprep.subr.mxu0 0.0
        %962 = vmatpush2.msra.mxu0 0.0
        %963 = vmatprep.subr.mxu0 0.0
        %964 = vmatpush2.msra.mxu0 0.0
        %965 = vmatprep.subr.mxu0 0.0
        %966 = vmatpush2.msra.mxu0 0.0
        %967 = vmatprep.subr.mxu0 0.0
        %968 = vmatpush2.msra.mxu0 0.0
        %969 = vmatprep.subr.mxu0 0.0
        %970 = vmatpush2.msra.mxu0 0.0
        %971 = vmatprep.subr.mxu0 0.0
        %972 = vmatpush2.msra.mxu0 0.0
        %973 = vmatprep.subr.mxu0 0.0
        %974 = vmatpush2.msra.mxu0 0.0
        %975 = vmatprep.subr.mxu0 0.0
        %976 = vmatpush2.msra.mxu0 0.0
        %977 = vmatprep.subr.mxu0 0.0
        %978 = vmatpush2.msra.mxu0 0.0
        %979 = vmatprep.mubr.f32.mxu0 0.0
        %980 = vmatmul.mubr.f32.gmra.mxu0 %v336
        %v981 = vpop.f32.mrf.mxu0
        %v982 = vadd.f32 0.0, %v981
        %v983 = vpop.f32.mrf.mxu0
        %984 = vmatprep.mubr.f32.mxu0 0.0
        %985 = vmatmul.mubr.f32.gmra.mxu0 %v339
        %v986 = vpop.f32.mrf.mxu0
        %v987 = vadd.f32 0.0, %v986
        %v988 = vpop.f32.mrf.mxu0
        %989 = vdwg.mxu0
        %v990 = vadd.f32 %v905, %v982
        %v991 = vadd.f32 %v906, %v987
        %992 = vst [vmem:[%s313] sm:$0xff] %v990
        %993 = vst [vmem:[%s313 + $0x8] sm:$0xff] %v991
        %s994 = sand.u32 %s164, 1
        %s995 = scalar_lea.sflag [#allocation4], %s994
        %s996 = sand.u32 %s164, 1
        %s997 = smul.addr %s996, 16
        %s998 = scalar_lea.vmem [#allocation10], %s997
        // Predicated region
        $region61: #{tpu_custom_call.1} parent=43 // pred_check
          %p999 = pneg %p174
        $region62: #{tpu_custom_call.1} parent=43 // pred_check_branch
          %1001 = sbr.rel (%p999) target = $region64
        $region63: #{tpu_custom_call.1} parent=43 // pred_region
          %s1003 = ssub.s32 256, 256
          %1004 = vsyncadd %s995, %s1003
          %s1005 = smul.addr %s25, 2
          %s1006 = smul.addr %s1005, 128
          %s1007 = scalar_lea.hbm %s6, %s1006
          %s1008 = sshll.u32 %s998, 4
          %s1009 = int_to_ptr.vmem [resolvable:$true] %s1008
          %1014 = dma.vmem_to_hbm [thread:$0]  %s1009, 256, %s1007, %s995, 128, 128, 8
        $region64: #{tpu_custom_call.1} parent=43 // pred_fallthru
          _
      $region44: #{tpu_custom_call.1} parent=5 // pred_fallthru
        _
      %p1015 = scmp.le.s32.totalorder 2, %s20
      // Predicated region
      $region65: #{tpu_custom_call.1} parent=5 // pred_check
        %p1016 = pneg %p1015
      $region66: #{tpu_custom_call.1} parent=5 // pred_check_branch
        %1018 = sbr.rel (%p1016) target = $region68
      $region67: #{tpu_custom_call.1} parent=5 // pred_region
        %s1019 = ssub.s32 %s20, 2
        // Predicated region
        $region69: #{tpu_custom_call.1} parent=67 // pred_check
          %p1020 = pneg %p180
        $region70: #{tpu_custom_call.1} parent=67 // pred_check_branch
          %1022 = sbr.rel (%p1020) target = $region72
        $region71: #{tpu_custom_call.1} parent=67 // pred_region
          %s1023 = sand.u32 %s165, 1
          %s1024 = scalar_lea.sflag [#allocation4], %s1023
          %s1025 = sand.u32 %s165, 1
          %s1026 = smul.addr %s1025, 16
          %s1027 = scalar_lea.vmem [#allocation10], %s1026
          %1028 = dma.done %s1024, 256
        $region72: #{tpu_custom_call.1} parent=67 // pred_fallthru
          _
      $region68: #{tpu_custom_call.1} parent=5 // pred_fallthru
        _
    $region6: #{tpu_custom_call.1} parent=1 // loop_footer
      %s24 = sadd.s32 1, %s20
    $region7: #{tpu_custom_call.1} parent=1 // loop_footer_branch
      %19 = sbr.rel target = $region3
    $region8: #{tpu_custom_call.1} parent=1 // loop_exit
      _
    %1029 = vsyncpa [#allocation3], 1
    %s1030 = scalar_lea.sflag [#allocation3], 1
    %1031 = vsyncpa %s1030, 1
    %1032 = vsyncpa [#allocation6], 1
    %1033 = vsyncpa [#allocation9], 1
    %1034 = vsyncpa [#allocation4], 1
    %s1035 = scalar_lea.sflag [#allocation4], 1
    %1036 = vsyncpa %s1035, 1

</llo_original>
